<compile_context>
chip_gen: v5e
topology: v5e:2x2
jax: 0.10.0
libtpu: 0.0.40
codegen_flags: <defaults>
</compile_context>

<pallas_src>
import functools

import jax
import jax.numpy as jnp
from jax.experimental import pallas as pl
from jax.experimental.pallas import tpu as pltpu


N_CLASSES = 10
N_CLASSES_PADDED = 128   # lane-dense output width (one full vreg lane dim)
HIDDEN3_PADDED = 128     # 64-wide hidden padded to a full lane width
NEG_BIG = -1e30          # pre-baked mask value for padded logit columns (f32)


def mlp2_kernel(x_ref,
                w1_ref, b1_ref,
                w2_ref, b2_ref,
                w3_ref, b3_ref,
                w4_ref, b4_ref,
                o_ref):
    # Cast f32 x -> bf16 in-kernel (VPU work hidden under the MXU); all four
    # matmuls are bf16 x bf16 on the MXU with f32 accumulation.
    x = x_ref[...].astype(jnp.bfloat16)

    # fc1 + relu
    h = jnp.dot(x, w1_ref[...], preferred_element_type=jnp.float32)
    h = jnp.maximum(h + b1_ref[...], 0.0).astype(jnp.bfloat16)
    # fc2 + relu
    h = jnp.dot(h, w2_ref[...], preferred_element_type=jnp.float32)
    h = jnp.maximum(h + b2_ref[...], 0.0).astype(jnp.bfloat16)
    # fc3 + relu (output padded 64 -> 128 with zero columns; zeros stay zero)
    h = jnp.dot(h, w3_ref[...], preferred_element_type=jnp.float32)
    h = jnp.maximum(h + b3_ref[...], 0.0).astype(jnp.bfloat16)
    # fc4: (bt, 128) @ (128, 128); padded w4 rows are zero, padded b4 columns
    # are -1e30, so padded logit lanes vanish in the softmax without a mask.
    logits = jnp.dot(h, w4_ref[...], preferred_element_type=jnp.float32)
    logits = logits + b4_ref[...]

    # softmax over the class axis (PyTorch dim=1), f32 math, exact reciprocal.
    m = jnp.max(logits, axis=-1, keepdims=True)
    e = jnp.exp(logits - m)
    denom = jnp.sum(e, axis=-1, keepdims=True)
    o_ref[...] = (e * pl.reciprocal(denom, approx=False)).astype(o_ref.dtype)


def _round_up(x, m):
    return ((x + m - 1) // m) * m


@functools.partial(jax.jit, static_argnames=("batch_tile",))
def mlp2_forward(x, params, batch_tile=512):
    """x: (B, 512) float32. params: dict of (in,out) f32 weights, (1,out) f32 biases."""
    B, D_in = x.shape
    assert D_in == 512

    # Tile selection:
    #  * cap at batch_tile (512 amortizes the ~0.35 us per-grid-step overhead),
    #  * aim for >= 2 grid steps once B is big enough (v7x: 2 TensorCores),
    #  * round to a multiple of 16 (bf16 sublane packing for the in-kernel cast).
    half = _round_up(max((B + 1) // 2, 1), 16)
    bt = max(16, min(batch_tile, half))
    B_pad = _round_up(B, bt)

    # x stays f32; pad the batch only when needed (padded rows are zeros and
    # are sliced away after the kernel — softmax is per-row so they are inert).
    if B_pad != B:
        x = jnp.pad(x, ((0, B_pad - B), (0, 0)))

    # Weights cast to bf16 once (outside the kernel); biases stay f32.
    w1 = params["w1"].astype(jnp.bfloat16)                       # (512, 256)
    w2 = params["w2"].astype(jnp.bfloat16)                       # (256, 128)
    b1, b2 = params["b1"], params["b2"]

    # Pad the 64-wide hidden to 128 (zero cols / zero rows: bitwise identical).
    pad_h = HIDDEN3_PADDED - params["w3"].shape[1]
    w3 = jnp.pad(params["w3"], ((0, 0), (0, pad_h))).astype(jnp.bfloat16)   # (128, 128)
    b3 = jnp.pad(params["b3"], ((0, 0), (0, pad_h)))                        # (1, 128)

    # Pad last layer to a lane-dense 128-wide output; zero rows for the padded
    # hidden, and -1e30 bias for the padded class columns (replaces the mask).
    pad_c = N_CLASSES_PADDED - N_CLASSES
    w4 = jnp.pad(params["w4"], ((0, pad_h), (0, pad_c))).astype(jnp.bfloat16)  # (128, 128)
    b4 = jnp.pad(params["b4"], ((0, 0), (0, pad_c)),
                 constant_values=NEG_BIG)                                      # (1, 128) f32

    # Full weight/bias blocks resident in VMEM (< 1 MiB total in bf16);
    # only the batch dimension is tiled across the grid.
    def full_spec(shape):
        return pl.BlockSpec(shape, lambda i: (0, 0))

    grid = (B_pad // bt,)
    out = pl.pallas_call(
        mlp2_kernel,
        out_shape=jax.ShapeDtypeStruct((B_pad, N_CLASSES_PADDED), jnp.bfloat16),
        grid_spec=pltpu.PrefetchScalarGridSpec(
            num_scalar_prefetch=0,
            grid=grid,
            in_specs=[
                pl.BlockSpec((bt, 512), lambda i: (i, 0)),   # f32 x tile
                full_spec(w1.shape), full_spec(b1.shape),
                full_spec(w2.shape), full_spec(b2.shape),
                full_spec(w3.shape), full_spec(b3.shape),
                full_spec(w4.shape), full_spec(b4.shape),
            ],
            out_specs=pl.BlockSpec((bt, N_CLASSES_PADDED), lambda i: (i, 0)),
        ),
        compiler_params=pltpu.CompilerParams(
            dimension_semantics=("parallel",),
            vmem_limit_bytes=32 * 1024 * 1024,
        ),
    )(x, w1, b1, w2, b2, w3, b3, w4, b4)

    return out[:B, :N_CLASSES].astype(jnp.float32)


def init_params(key):
    """Deterministic init mimicking PyTorch Linear's U(-1/sqrt(fan_in), +1/sqrt(fan_in)).

    Weights are stored as (in_features, out_features); biases as (1, out_features).
    """
    dims = [(512, 256), (256, 128), (128, 64), (64, N_CLASSES)]
    params = {}
    for idx, (fan_in, fan_out) in enumerate(dims, start=1):
        key, kw, kb = jax.random.split(key, 3)
        bound = 1.0 / jnp.sqrt(jnp.float32(fan_in))
        params[f"w{idx}"] = jax.random.uniform(
            kw, (fan_in, fan_out), jnp.float32, -bound, bound)
        params[f"b{idx}"] = jax.random.uniform(
            kb, (1, fan_out), jnp.float32, -bound, bound)
    return params


def mlp2_reference_f32(x, params):
    h = jnp.maximum(x @ params["w1"] + params["b1"], 0.0)
    h = jnp.maximum(h @ params["w2"] + params["b2"], 0.0)
    h = jnp.maximum(h @ params["w3"] + params["b3"], 0.0)
    logits = h @ params["w4"] + params["b4"]
    return jax.nn.softmax(logits, axis=1)


def mlp2_reference_bf16(x, params):
    """Reference with the same bf16-operand / f32-accumulate matmuls as the kernel."""
    h = x.astype(jnp.bfloat16)
    for i in (1, 2, 3):
        h = jnp.dot(h, params[f"w{i}"].astype(jnp.bfloat16),
                    preferred_element_type=jnp.float32)
        h = jnp.maximum(h + params[f"b{i}"], 0.0).astype(jnp.bfloat16)
    logits = jnp.dot(h, params["w4"].astype(jnp.bfloat16),
                     preferred_element_type=jnp.float32) + params["b4"]
    return jax.nn.softmax(logits, axis=1)


if __name__ == "__main__":
    key = jax.random.PRNGKey(0)
    key, kx = jax.random.split(key)
    batch = 8
    x = jax.random.normal(kx, (batch, 512), jnp.float32)
    params = init_params(key)

    out = jax.block_until_ready(mlp2_forward(x, params))

    ref_matched = mlp2_reference_bf16(x, params)
    ref_f32 = mlp2_reference_f32(x, params)

    assert out.shape == (batch, N_CLASSES)
    # probabilities sum to 1 (bf16 output rounding -> small slack)
    assert jnp.allclose(jnp.sum(out, axis=1), 1.0, atol=1e-2)
    # tight check vs. a reference using identical bf16 matmul precision
    assert jnp.allclose(out, ref_matched, atol=1e-2, rtol=1e-2)
    # loose check vs. the full-f32 PyTorch-equivalent reference
    assert jnp.allclose(out, ref_f32, atol=5e-2, rtol=5e-2)

    print("KERNEL_OK")
</pallas_src>

<mosaic_0001>
module attributes {stable_mosaic.version = 11 : i64} {
  func.func @mlp2_kernel(%arg0: i32, %arg1: memref<16x512xf32, #tpu.memory_space<vmem>>, %arg2: memref<512x256xbf16, #tpu.memory_space<vmem>>, %arg3: memref<1x256xf32, #tpu.memory_space<vmem>>, %arg4: memref<256x128xbf16, #tpu.memory_space<vmem>>, %arg5: memref<1x128xf32, #tpu.memory_space<vmem>>, %arg6: memref<128x128xbf16, #tpu.memory_space<vmem>>, %arg7: memref<1x128xf32, #tpu.memory_space<vmem>>, %arg8: memref<128x128xbf16, #tpu.memory_space<vmem>>, %arg9: memref<1x128xf32, #tpu.memory_space<vmem>>, %arg10: memref<16x128xbf16, #tpu.memory_space<vmem>>) attributes {dimension_semantics = [#tpu.dimension_semantics<parallel>], iteration_bounds = array<i64: 1>, scalar_prefetch = 0 : i64, scratch_operands = 0 : i64, tpu.core_type = #tpu.core_type<tc>, window_params = [{transform_indices = @transform_0, window_bounds = array<i64: 16, 512>}, {pipeline_mode = #tpu.pipeline_mode<synchronous>, transform_indices = @transform_1, window_bounds = array<i64: 512, 256>}, {pipeline_mode = #tpu.pipeline_mode<synchronous>, transform_indices = @transform_2, window_bounds = array<i64: 1, 256>}, {pipeline_mode = #tpu.pipeline_mode<synchronous>, transform_indices = @transform_3, window_bounds = array<i64: 256, 128>}, {pipeline_mode = #tpu.pipeline_mode<synchronous>, transform_indices = @transform_4, window_bounds = array<i64: 1, 128>}, {pipeline_mode = #tpu.pipeline_mode<synchronous>, transform_indices = @transform_5, window_bounds = array<i64: 128, 128>}, {pipeline_mode = #tpu.pipeline_mode<synchronous>, transform_indices = @transform_6, window_bounds = array<i64: 1, 128>}, {pipeline_mode = #tpu.pipeline_mode<synchronous>, transform_indices = @transform_7, window_bounds = array<i64: 128, 128>}, {pipeline_mode = #tpu.pipeline_mode<synchronous>, transform_indices = @transform_8, window_bounds = array<i64: 1, 128>}, {transform_indices = @transform_9, window_bounds = array<i64: 16, 128>}]} {
    %c0 = arith.constant 0 : index
    %c0_0 = arith.constant 0 : index
    %0 = vector.load %arg1[%c0, %c0_0] : memref<16x512xf32, #tpu.memory_space<vmem>>, vector<16x512xf32>
    %1 = arith.truncf %0 : vector<16x512xf32> to vector<16x512xbf16>
    %c0_1 = arith.constant 0 : index
    %c0_2 = arith.constant 0 : index
    %2 = vector.load %arg2[%c0_1, %c0_2] : memref<512x256xbf16, #tpu.memory_space<vmem>>, vector<512x256xbf16>
    %cst = arith.constant dense<0.000000e+00> : vector<16x256xf32>
    %3 = tpu.matmul %1, %2, %cst {dimension_numbers = #tpu.dot_dimension_numbers<[1], [0], [0], [1], [0, 0, 1, 1], [], []>} : vector<16x512xbf16>, vector<512x256xbf16>, vector<16x256xf32> -> vector<16x256xf32>
    %c0_3 = arith.constant 0 : index
    %c0_4 = arith.constant 0 : index
    %4 = vector.load %arg3[%c0_3, %c0_4] : memref<1x256xf32, #tpu.memory_space<vmem>>, vector<1x256xf32>
    %5 = vector.broadcast %4 : vector<1x256xf32> to vector<16x256xf32>
    %6 = arith.addf %3, %5 : vector<16x256xf32>
    %cst_5 = arith.constant 0.000000e+00 : f32
    %7 = vector.broadcast %cst_5 : f32 to vector<16x256xf32>
    %8 = arith.maximumf %6, %7 : vector<16x256xf32>
    %9 = arith.truncf %8 : vector<16x256xf32> to vector<16x256xbf16>
    %c0_6 = arith.constant 0 : index
    %c0_7 = arith.constant 0 : index
    %10 = vector.load %arg4[%c0_6, %c0_7] : memref<256x128xbf16, #tpu.memory_space<vmem>>, vector<256x128xbf16>
    %cst_8 = arith.constant dense<0.000000e+00> : vector<16x128xf32>
    %11 = tpu.matmul %9, %10, %cst_8 {dimension_numbers = #tpu.dot_dimension_numbers<[1], [0], [0], [1], [0, 0, 1, 1], [], []>} : vector<16x256xbf16>, vector<256x128xbf16>, vector<16x128xf32> -> vector<16x128xf32>
    %c0_9 = arith.constant 0 : index
    %c0_10 = arith.constant 0 : index
    %12 = vector.load %arg5[%c0_9, %c0_10] : memref<1x128xf32, #tpu.memory_space<vmem>>, vector<1x128xf32>
    %13 = vector.broadcast %12 : vector<1x128xf32> to vector<16x128xf32>
    %14 = arith.addf %11, %13 : vector<16x128xf32>
    %cst_11 = arith.constant 0.000000e+00 : f32
    %15 = vector.broadcast %cst_11 : f32 to vector<16x128xf32>
    %16 = arith.maximumf %14, %15 : vector<16x128xf32>
    %17 = arith.truncf %16 : vector<16x128xf32> to vector<16x128xbf16>
    %c0_12 = arith.constant 0 : index
    %c0_13 = arith.constant 0 : index
    %18 = vector.load %arg6[%c0_12, %c0_13] : memref<128x128xbf16, #tpu.memory_space<vmem>>, vector<128x128xbf16>
    %cst_14 = arith.constant dense<0.000000e+00> : vector<16x128xf32>
    %19 = tpu.matmul %17, %18, %cst_14 {dimension_numbers = #tpu.dot_dimension_numbers<[1], [0], [0], [1], [0, 0, 1, 1], [], []>} : vector<16x128xbf16>, vector<128x128xbf16>, vector<16x128xf32> -> vector<16x128xf32>
    %c0_15 = arith.constant 0 : index
    %c0_16 = arith.constant 0 : index
    %20 = vector.load %arg7[%c0_15, %c0_16] : memref<1x128xf32, #tpu.memory_space<vmem>>, vector<1x128xf32>
    %21 = vector.broadcast %20 : vector<1x128xf32> to vector<16x128xf32>
    %22 = arith.addf %19, %21 : vector<16x128xf32>
    %cst_17 = arith.constant 0.000000e+00 : f32
    %23 = vector.broadcast %cst_17 : f32 to vector<16x128xf32>
    %24 = arith.maximumf %22, %23 : vector<16x128xf32>
    %25 = arith.truncf %24 : vector<16x128xf32> to vector<16x128xbf16>
    %c0_18 = arith.constant 0 : index
    %c0_19 = arith.constant 0 : index
    %26 = vector.load %arg8[%c0_18, %c0_19] : memref<128x128xbf16, #tpu.memory_space<vmem>>, vector<128x128xbf16>
    %cst_20 = arith.constant dense<0.000000e+00> : vector<16x128xf32>
    %27 = tpu.matmul %25, %26, %cst_20 {dimension_numbers = #tpu.dot_dimension_numbers<[1], [0], [0], [1], [0, 0, 1, 1], [], []>} : vector<16x128xbf16>, vector<128x128xbf16>, vector<16x128xf32> -> vector<16x128xf32>
    %c0_21 = arith.constant 0 : index
    %c0_22 = arith.constant 0 : index
    %28 = vector.load %arg9[%c0_21, %c0_22] : memref<1x128xf32, #tpu.memory_space<vmem>>, vector<1x128xf32>
    %29 = vector.broadcast %28 : vector<1x128xf32> to vector<16x128xf32>
    %30 = arith.addf %27, %29 : vector<16x128xf32>
    %cst_23 = arith.constant dense<0xFF800000> : vector<16xf32>
    %31 = vector.multi_reduction <maximumf>, %30, %cst_23 [1] : vector<16x128xf32> to vector<16xf32>
    %32 = vector.shape_cast %31 : vector<16xf32> to vector<16x1xf32>
    %33 = vector.broadcast %32 : vector<16x1xf32> to vector<16x128xf32>
    %34 = arith.subf %30, %33 : vector<16x128xf32>
    %35 = math.exp %34 : vector<16x128xf32>
    %cst_24 = arith.constant dense<0.000000e+00> : vector<16xf32>
    %36 = vector.multi_reduction <add>, %35, %cst_24 [1] : vector<16x128xf32> to vector<16xf32>
    %37 = vector.shape_cast %36 : vector<16xf32> to vector<16x1xf32>
    %38 = tpu.reciprocal %37 : vector<16x1xf32> -> vector<16x1xf32>
    %39 = vector.broadcast %38 : vector<16x1xf32> to vector<16x128xf32>
    %40 = arith.mulf %35, %39 : vector<16x128xf32>
    %41 = arith.truncf %40 : vector<16x128xf32> to vector<16x128xbf16>
    %c0_25 = arith.constant 0 : index
    %c0_26 = arith.constant 0 : index
    %42 = vector.load %arg10[%c0_25, %c0_26] : memref<16x128xbf16, #tpu.memory_space<vmem>>, vector<16x128xbf16>
    tpu.vector_store %arg10[%c0_25, %c0_26], %41 {strides = array<i32>} : memref<16x128xbf16, #tpu.memory_space<vmem>>, vector<16x128xbf16>,
    return
  }
  func.func @transform_0(%arg0: i32) -> (i32, i32) {
    %c0_i32 = arith.constant 0 : i32
    %c0_i32_0 = arith.constant 0 : i32
    return %arg0, %c0_i32 : i32, i32
  }
  func.func @transform_1(%arg0: i32) -> (i32, i32) {
    %c0_i32 = arith.constant 0 : i32
    %c0_i32_0 = arith.constant 0 : i32
    %c0_i32_1 = arith.constant 0 : i32
    return %c0_i32, %c0_i32_0 : i32, i32
  }
  func.func @transform_2(%arg0: i32) -> (i32, i32) {
    %c0_i32 = arith.constant 0 : i32
    %c0_i32_0 = arith.constant 0 : i32
    %c0_i32_1 = arith.constant 0 : i32
    return %c0_i32, %c0_i32_0 : i32, i32
  }
  func.func @transform_3(%arg0: i32) -> (i32, i32) {
    %c0_i32 = arith.constant 0 : i32
    %c0_i32_0 = arith.constant 0 : i32
    %c0_i32_1 = arith.constant 0 : i32
    return %c0_i32, %c0_i32_0 : i32, i32
  }
  func.func @transform_4(%arg0: i32) -> (i32, i32) {
    %c0_i32 = arith.constant 0 : i32
    %c0_i32_0 = arith.constant 0 : i32
    %c0_i32_1 = arith.constant 0 : i32
    return %c0_i32, %c0_i32_0 : i32, i32
  }
  func.func @transform_5(%arg0: i32) -> (i32, i32) {
    %c0_i32 = arith.constant 0 : i32
    %c0_i32_0 = arith.constant 0 : i32
    %c0_i32_1 = arith.constant 0 : i32
    return %c0_i32, %c0_i32_0 : i32, i32
  }
  func.func @transform_6(%arg0: i32) -> (i32, i32) {
    %c0_i32 = arith.constant 0 : i32
    %c0_i32_0 = arith.constant 0 : i32
    %c0_i32_1 = arith.constant 0 : i32
    return %c0_i32, %c0_i32_0 : i32, i32
  }
  func.func @transform_7(%arg0: i32) -> (i32, i32) {
    %c0_i32 = arith.constant 0 : i32
    %c0_i32_0 = arith.constant 0 : i32
    %c0_i32_1 = arith.constant 0 : i32
    return %c0_i32, %c0_i32_0 : i32, i32
  }
  func.func @transform_8(%arg0: i32) -> (i32, i32) {
    %c0_i32 = arith.constant 0 : i32
    %c0_i32_0 = arith.constant 0 : i32
    %c0_i32_1 = arith.constant 0 : i32
    return %c0_i32, %c0_i32_0 : i32, i32
  }
  func.func @transform_9(%arg0: i32) -> (i32, i32) {
    %c0_i32 = arith.constant 0 : i32
    %c0_i32_0 = arith.constant 0 : i32
    return %arg0, %c0_i32 : i32, i32
  }
}

</mosaic_0001>

<llo_original>
// kernel: mlp2_forward.1
$region0: #{mlp2_forward.1}
  #allocation0 [shape = 'u32[]', space=smem, size = 0x4, offset = 0x4, fixed_abs, tag = 'smem constant byte address 0x4 - core index']
  #allocation1 [shape = 'u32[72,128]{1,0:T(1,128)}', space=vmem, size = 0x9000, scoped, tag = 'internal scratch']
  %s0 = inlined_call_operand.vmem [shape: f32[16,512], index: 0, kind: input, shape index: {}]
  %s1 = inlined_call_operand.vmem [shape: bf16[512,256], index: 1, kind: input, shape index: {}]
  %s2 = inlined_call_operand.vmem [shape: f32[1,256], index: 2, kind: input, shape index: {}]
  %s3 = inlined_call_operand.vmem [shape: bf16[256,128], index: 3, kind: input, shape index: {}]
  %s4 = inlined_call_operand.vmem [shape: f32[1,128], index: 4, kind: input, shape index: {}]
  %s5 = inlined_call_operand.vmem [shape: bf16[128,128], index: 5, kind: input, shape index: {}]
  %s6 = inlined_call_operand.vmem [shape: f32[1,128], index: 6, kind: input, shape index: {}]
  %s7 = inlined_call_operand.vmem [shape: bf16[128,128], index: 7, kind: input, shape index: {}]
  %s8 = inlined_call_operand.vmem [shape: f32[1,128], index: 8, kind: input, shape index: {}]
  %s9 = inlined_call_operand.vmem [shape: bf16[16,128], index: 9, kind: output, shape index: {}]
  %s10 = sld [smem:[#allocation0]]
  $region46: #{mlp2_forward.1} parent=0
    _
  %s12 = ssub.s32 1, %s10
  %s13 = scalar_select 0, %s12, %s10
  // Predicated region
  $region2: #{mlp2_forward.1} parent=0 // pred_check
    _
  $region3: #{mlp2_forward.1} parent=0 // pred_check_branch
    %15 = sbr.rel (0) target = $region5
  $region4: #{mlp2_forward.1} parent=0 // pred_region
    _
  $region5: #{mlp2_forward.1} parent=0 // pred_fallthru
    _
  // Predicated region
  $region6: #{mlp2_forward.1} parent=0 // pred_check
    _
  $region7: #{mlp2_forward.1} parent=0 // pred_check_branch
    %17 = sbr.rel (0) target = $region9
  $region8: #{mlp2_forward.1} parent=0 // pred_region
    _
  $region9: #{mlp2_forward.1} parent=0 // pred_fallthru
    _
  // Predicated region
  $region10: #{mlp2_forward.1} parent=0 // pred_check
    _
  $region11: #{mlp2_forward.1} parent=0 // pred_check_branch
    %19 = sbr.rel (0) target = $region13
  $region12: #{mlp2_forward.1} parent=0 // pred_region
    _
  $region13: #{mlp2_forward.1} parent=0 // pred_fallthru
    _
  // Predicated region
  $region14: #{mlp2_forward.1} parent=0 // pred_check
    _
  $region15: #{mlp2_forward.1} parent=0 // pred_check_branch
    %21 = sbr.rel (0) target = $region17
  $region16: #{mlp2_forward.1} parent=0 // pred_region
    _
  $region17: #{mlp2_forward.1} parent=0 // pred_fallthru
    _
  // Predicated region
  $region18: #{mlp2_forward.1} parent=0 // pred_check
    _
  $region19: #{mlp2_forward.1} parent=0 // pred_check_branch
    %23 = sbr.rel (0) target = $region21
  $region20: #{mlp2_forward.1} parent=0 // pred_region
    _
  $region21: #{mlp2_forward.1} parent=0 // pred_fallthru
    _
  // Predicated region
  $region22: #{mlp2_forward.1} parent=0 // pred_check
    _
  $region23: #{mlp2_forward.1} parent=0 // pred_check_branch
    %25 = sbr.rel (0) target = $region25
  $region24: #{mlp2_forward.1} parent=0 // pred_region
    _
  $region25: #{mlp2_forward.1} parent=0 // pred_fallthru
    _
  // Predicated region
  $region26: #{mlp2_forward.1} parent=0 // pred_check
    _
  $region27: #{mlp2_forward.1} parent=0 // pred_check_branch
    %27 = sbr.rel (0) target = $region29
  $region28: #{mlp2_forward.1} parent=0 // pred_region
    _
  $region29: #{mlp2_forward.1} parent=0 // pred_fallthru
    _
  // Predicated region
  $region30: #{mlp2_forward.1} parent=0 // pred_check
    _
  $region31: #{mlp2_forward.1} parent=0 // pred_check_branch
    %29 = sbr.rel (0) target = $region33
  $region32: #{mlp2_forward.1} parent=0 // pred_region
    _
  $region33: #{mlp2_forward.1} parent=0 // pred_fallthru
    _
  // Predicated region
  $region34: #{mlp2_forward.1} parent=0 // pred_check
    _
  $region35: #{mlp2_forward.1} parent=0 // pred_check_branch
    %31 = sbr.rel (0) target = $region37
  $region36: #{mlp2_forward.1} parent=0 // pred_region
    _
  $region37: #{mlp2_forward.1} parent=0 // pred_fallthru
    _
  %v32 = vld [vmem:[%s0] sm:$0xff]
  %v33 = vld [vmem:[%s0 + $0x8] sm:$0xff]
  %v34 = vld [vmem:[%s0 + $0x10] sm:$0xff]
  %v35 = vld [vmem:[%s0 + $0x18] sm:$0xff]
  %v36 = vld [vmem:[%s0 + $0x20] sm:$0xff]
  %v37 = vld [vmem:[%s0 + $0x28] sm:$0xff]
  %v38 = vld [vmem:[%s0 + $0x30] sm:$0xff]
  %v39 = vld [vmem:[%s0 + $0x38] sm:$0xff]
  %v40 = vpack.c.bf16 %v36, %v32
  %v41 = vpack.c.bf16 %v37, %v33
  %v42 = vpack.c.bf16 %v38, %v34
  %v43 = vpack.c.bf16 %v39, %v35
  %v44 = vld [vmem:[%s1] sm:$0xff]
  %v45 = vld [vmem:[%s1 + $0x8] sm:$0xff]
  %v46 = vld [vmem:[%s1 + $0x10] sm:$0xff]
  %v47 = vld [vmem:[%s1 + $0x18] sm:$0xff]
  %v48 = vld [vmem:[%s1 + $0x20] sm:$0xff]
  %v49 = vld [vmem:[%s1 + $0x28] sm:$0xff]
  %v50 = vld [vmem:[%s1 + $0x30] sm:$0xff]
  %v51 = vld [vmem:[%s1 + $0x38] sm:$0xff]
  %v52 = vld [vmem:[%s1 + $0x40] sm:$0xff]
  %v53 = vld [vmem:[%s1 + $0x48] sm:$0xff]
  %v54 = vld [vmem:[%s1 + $0x50] sm:$0xff]
  %v55 = vld [vmem:[%s1 + $0x58] sm:$0xff]
  %v56 = vld [vmem:[%s1 + $0x60] sm:$0xff]
  %v57 = vld [vmem:[%s1 + $0x68] sm:$0xff]
  %v58 = vld [vmem:[%s1 + $0x70] sm:$0xff]
  %v59 = vld [vmem:[%s1 + $0x78] sm:$0xff]
  %v60 = vld [vmem:[%s1 + $0x80] sm:$0xff]
  %v61 = vld [vmem:[%s1 + $0x88] sm:$0xff]
  %v62 = vld [vmem:[%s1 + $0x90] sm:$0xff]
  %v63 = vld [vmem:[%s1 + $0x98] sm:$0xff]
  %v64 = vld [vmem:[%s1 + $0xa0] sm:$0xff]
  %v65 = vld [vmem:[%s1 + $0xa8] sm:$0xff]
  %v66 = vld [vmem:[%s1 + $0xb0] sm:$0xff]
  %v67 = vld [vmem:[%s1 + $0xb8] sm:$0xff]
  %v68 = vld [vmem:[%s1 + $0xc0] sm:$0xff]
  %v69 = vld [vmem:[%s1 + $0xc8] sm:$0xff]
  %v70 = vld [vmem:[%s1 + $0xd0] sm:$0xff]
  %v71 = vld [vmem:[%s1 + $0xd8] sm:$0xff]
  %v72 = vld [vmem:[%s1 + $0xe0] sm:$0xff]
  %v73 = vld [vmem:[%s1 + $0xe8] sm:$0xff]
  %v74 = vld [vmem:[%s1 + $0xf0] sm:$0xff]
  %v75 = vld [vmem:[%s1 + $0xf8] sm:$0xff]
  %v76 = vld [vmem:[%s1 + $0x100] sm:$0xff]
  %v77 = vld [vmem:[%s1 + $0x108] sm:$0xff]
  %v78 = vld [vmem:[%s1 + $0x110] sm:$0xff]
  %v79 = vld [vmem:[%s1 + $0x118] sm:$0xff]
  %v80 = vld [vmem:[%s1 + $0x120] sm:$0xff]
  %v81 = vld [vmem:[%s1 + $0x128] sm:$0xff]
  %v82 = vld [vmem:[%s1 + $0x130] sm:$0xff]
  %v83 = vld [vmem:[%s1 + $0x138] sm:$0xff]
  %v84 = vld [vmem:[%s1 + $0x140] sm:$0xff]
  %v85 = vld [vmem:[%s1 + $0x148] sm:$0xff]
  %v86 = vld [vmem:[%s1 + $0x150] sm:$0xff]
  %v87 = vld [vmem:[%s1 + $0x158] sm:$0xff]
  %v88 = vld [vmem:[%s1 + $0x160] sm:$0xff]
  %v89 = vld [vmem:[%s1 + $0x168] sm:$0xff]
  %v90 = vld [vmem:[%s1 + $0x170] sm:$0xff]
  %v91 = vld [vmem:[%s1 + $0x178] sm:$0xff]
  %v92 = vld [vmem:[%s1 + $0x180] sm:$0xff]
  %v93 = vld [vmem:[%s1 + $0x188] sm:$0xff]
  %v94 = vld [vmem:[%s1 + $0x190] sm:$0xff]
  %v95 = vld [vmem:[%s1 + $0x198] sm:$0xff]
  %v96 = vld [vmem:[%s1 + $0x1a0] sm:$0xff]
  %v97 = vld [vmem:[%s1 + $0x1a8] sm:$0xff]
  %v98 = vld [vmem:[%s1 + $0x1b0] sm:$0xff]
  %v99 = vld [vmem:[%s1 + $0x1b8] sm:$0xff]
  %v100 = vld [vmem:[%s1 + $0x1c0] sm:$0xff]
  %v101 = vld [vmem:[%s1 + $0x1c8] sm:$0xff]
  %v102 = vld [vmem:[%s1 + $0x1d0] sm:$0xff]
  %v103 = vld [vmem:[%s1 + $0x1d8] sm:$0xff]
  %v104 = vld [vmem:[%s1 + $0x1e0] sm:$0xff]
  %v105 = vld [vmem:[%s1 + $0x1e8] sm:$0xff]
  %v106 = vld [vmem:[%s1 + $0x1f0] sm:$0xff]
  %v107 = vld [vmem:[%s1 + $0x1f8] sm:$0xff]
  %v108 = vld [vmem:[%s2] sm:$0x3]
  %v110 = vperm.slane %v108, 0
  %v111 = vperm.slane %v108, 1
  %v178 = vunpack.c.l.b16 %v44
  %v179 = vunpack.c.h.b16 %v44
  %v180 = vunpack.c.l.b16 %v45
  %v181 = vunpack.c.h.b16 %v45
  %v182 = vunpack.c.l.b16 %v46
  %v183 = vunpack.c.h.b16 %v46
  %v184 = vunpack.c.l.b16 %v47
  %v185 = vunpack.c.h.b16 %v47
  %v186 = vunpack.c.l.b16 %v48
  %v187 = vunpack.c.h.b16 %v48
  %v188 = vunpack.c.l.b16 %v49
  %v189 = vunpack.c.h.b16 %v49
  %v190 = vunpack.c.l.b16 %v50
  %v191 = vunpack.c.h.b16 %v50
  %v192 = vunpack.c.l.b16 %v51
  %v193 = vunpack.c.h.b16 %v51
  %v194 = vunpack.c.l.b16 %v52
  %v195 = vunpack.c.h.b16 %v52
  %v196 = vunpack.c.l.b16 %v53
  %v197 = vunpack.c.h.b16 %v53
  %v198 = vunpack.c.l.b16 %v54
  %v199 = vunpack.c.h.b16 %v54
  %v200 = vunpack.c.l.b16 %v55
  %v201 = vunpack.c.h.b16 %v55
  %v202 = vunpack.c.l.b16 %v56
  %v203 = vunpack.c.h.b16 %v56
  %v204 = vunpack.c.l.b16 %v57
  %v205 = vunpack.c.h.b16 %v57
  %v206 = vunpack.c.l.b16 %v58
  %v207 = vunpack.c.h.b16 %v58
  %v208 = vunpack.c.l.b16 %v59
  %v209 = vunpack.c.h.b16 %v59
  %v210 = vunpack.c.l.b16 %v60
  %v211 = vunpack.c.h.b16 %v60
  %v212 = vunpack.c.l.b16 %v61
  %v213 = vunpack.c.h.b16 %v61
  %v214 = vunpack.c.l.b16 %v62
  %v215 = vunpack.c.h.b16 %v62
  %v216 = vunpack.c.l.b16 %v63
  %v217 = vunpack.c.h.b16 %v63
  %v218 = vunpack.c.l.b16 %v64
  %v219 = vunpack.c.h.b16 %v64
  %v220 = vunpack.c.l.b16 %v65
  %v221 = vunpack.c.h.b16 %v65
  %v222 = vunpack.c.l.b16 %v66
  %v223 = vunpack.c.h.b16 %v66
  %v224 = vunpack.c.l.b16 %v67
  %v225 = vunpack.c.h.b16 %v67
  %v226 = vunpack.c.l.b16 %v68
  %v227 = vunpack.c.h.b16 %v68
  %v228 = vunpack.c.l.b16 %v69
  %v229 = vunpack.c.h.b16 %v69
  %v230 = vunpack.c.l.b16 %v70
  %v231 = vunpack.c.h.b16 %v70
  %v232 = vunpack.c.l.b16 %v71
  %v233 = vunpack.c.h.b16 %v71
  %v234 = vunpack.c.l.b16 %v72
  %v235 = vunpack.c.h.b16 %v72
  %v236 = vunpack.c.l.b16 %v73
  %v237 = vunpack.c.h.b16 %v73
  %v238 = vunpack.c.l.b16 %v74
  %v239 = vunpack.c.h.b16 %v74
  %v240 = vunpack.c.l.b16 %v75
  %v241 = vunpack.c.h.b16 %v75
  %v242 = vunpack.c.l.b16 %v76
  %v243 = vunpack.c.h.b16 %v76
  %v244 = vunpack.c.l.b16 %v77
  %v245 = vunpack.c.h.b16 %v77
  %v246 = vunpack.c.l.b16 %v78
  %v247 = vunpack.c.h.b16 %v78
  %v248 = vunpack.c.l.b16 %v79
  %v249 = vunpack.c.h.b16 %v79
  %v250 = vunpack.c.l.b16 %v80
  %v251 = vunpack.c.h.b16 %v80
  %v252 = vunpack.c.l.b16 %v81
  %v253 = vunpack.c.h.b16 %v81
  %v254 = vunpack.c.l.b16 %v82
  %v255 = vunpack.c.h.b16 %v82
  %v256 = vunpack.c.l.b16 %v83
  %v257 = vunpack.c.h.b16 %v83
  %v258 = vunpack.c.l.b16 %v84
  %v259 = vunpack.c.h.b16 %v84
  %v260 = vunpack.c.l.b16 %v85
  %v261 = vunpack.c.h.b16 %v85
  %v262 = vunpack.c.l.b16 %v86
  %v263 = vunpack.c.h.b16 %v86
  %v264 = vunpack.c.l.b16 %v87
  %v265 = vunpack.c.h.b16 %v87
  %v266 = vunpack.c.l.b16 %v88
  %v267 = vunpack.c.h.b16 %v88
  %v268 = vunpack.c.l.b16 %v89
  %v269 = vunpack.c.h.b16 %v89
  %v270 = vunpack.c.l.b16 %v90
  %v271 = vunpack.c.h.b16 %v90
  %v272 = vunpack.c.l.b16 %v91
  %v273 = vunpack.c.h.b16 %v91
  %v274 = vunpack.c.l.b16 %v92
  %v275 = vunpack.c.h.b16 %v92
  %v276 = vunpack.c.l.b16 %v93
  %v277 = vunpack.c.h.b16 %v93
  %v278 = vunpack.c.l.b16 %v94
  %v279 = vunpack.c.h.b16 %v94
  %v280 = vunpack.c.l.b16 %v95
  %v281 = vunpack.c.h.b16 %v95
  %v282 = vunpack.c.l.b16 %v96
  %v283 = vunpack.c.h.b16 %v96
  %v284 = vunpack.c.l.b16 %v97
  %v285 = vunpack.c.h.b16 %v97
  %v286 = vunpack.c.l.b16 %v98
  %v287 = vunpack.c.h.b16 %v98
  %v288 = vunpack.c.l.b16 %v99
  %v289 = vunpack.c.h.b16 %v99
  %v290 = vunpack.c.l.b16 %v100
  %v291 = vunpack.c.h.b16 %v100
  %v292 = vunpack.c.l.b16 %v101
  %v293 = vunpack.c.h.b16 %v101
  %v294 = vunpack.c.l.b16 %v102
  %v295 = vunpack.c.h.b16 %v102
  %v296 = vunpack.c.l.b16 %v103
  %v297 = vunpack.c.h.b16 %v103
  %v298 = vunpack.c.l.b16 %v104
  %v299 = vunpack.c.h.b16 %v104
  %v300 = vunpack.c.l.b16 %v105
  %v301 = vunpack.c.h.b16 %v105
  %v302 = vunpack.c.l.b16 %v106
  %v303 = vunpack.c.h.b16 %v106
  %v304 = vunpack.c.l.b16 %v107
  %v305 = vunpack.c.h.b16 %v107
  %v306 = vpack.c.b16 %v180, %v178
  %v307 = vpack.c.b16 %v181, %v179
  %v308 = vpack.c.b16 %v184, %v182
  %v309 = vpack.c.b16 %v185, %v183
  %v310 = vpack.c.b16 %v188, %v186
  %v311 = vpack.c.b16 %v189, %v187
  %v312 = vpack.c.b16 %v192, %v190
  %v313 = vpack.c.b16 %v193, %v191
  %v314 = vpack.c.b16 %v196, %v194
  %v315 = vpack.c.b16 %v197, %v195
  %v316 = vpack.c.b16 %v200, %v198
  %v317 = vpack.c.b16 %v201, %v199
  %v318 = vpack.c.b16 %v204, %v202
  %v319 = vpack.c.b16 %v205, %v203
  %v320 = vpack.c.b16 %v208, %v206
  %v321 = vpack.c.b16 %v209, %v207
  %v322 = vpack.c.b16 %v212, %v210
  %v323 = vpack.c.b16 %v213, %v211
  %v324 = vpack.c.b16 %v216, %v214
  %v325 = vpack.c.b16 %v217, %v215
  %v326 = vpack.c.b16 %v220, %v218
  %v327 = vpack.c.b16 %v221, %v219
  %v328 = vpack.c.b16 %v224, %v222
  %v329 = vpack.c.b16 %v225, %v223
  %v330 = vpack.c.b16 %v228, %v226
  %v331 = vpack.c.b16 %v229, %v227
  %v332 = vpack.c.b16 %v232, %v230
  %v333 = vpack.c.b16 %v233, %v231
  %v334 = vpack.c.b16 %v236, %v234
  %v335 = vpack.c.b16 %v237, %v235
  %v336 = vpack.c.b16 %v240, %v238
  %v337 = vpack.c.b16 %v241, %v239
  %v338 = vpack.c.b16 %v244, %v242
  %v339 = vpack.c.b16 %v245, %v243
  %v340 = vpack.c.b16 %v248, %v246
  %v341 = vpack.c.b16 %v249, %v247
  %v342 = vpack.c.b16 %v252, %v250
  %v343 = vpack.c.b16 %v253, %v251
  %v344 = vpack.c.b16 %v256, %v254
  %v345 = vpack.c.b16 %v257, %v255
  %v346 = vpack.c.b16 %v260, %v258
  %v347 = vpack.c.b16 %v261, %v259
  %v348 = vpack.c.b16 %v264, %v262
  %v349 = vpack.c.b16 %v265, %v263
  %v350 = vpack.c.b16 %v268, %v266
  %v351 = vpack.c.b16 %v269, %v267
  %v352 = vpack.c.b16 %v272, %v270
  %v353 = vpack.c.b16 %v273, %v271
  %v354 = vpack.c.b16 %v276, %v274
  %v355 = vpack.c.b16 %v277, %v275
  %v356 = vpack.c.b16 %v280, %v278
  %v357 = vpack.c.b16 %v281, %v279
  %v358 = vpack.c.b16 %v284, %v282
  %v359 = vpack.c.b16 %v285, %v283
  %v360 = vpack.c.b16 %v288, %v286
  %v361 = vpack.c.b16 %v289, %v287
  %v362 = vpack.c.b16 %v292, %v290
  %v363 = vpack.c.b16 %v293, %v291
  %v364 = vpack.c.b16 %v296, %v294
  %v365 = vpack.c.b16 %v297, %v295
  %v366 = vpack.c.b16 %v300, %v298
  %v367 = vpack.c.b16 %v301, %v299
  %v368 = vpack.c.b16 %v304, %v302
  %v369 = vpack.c.b16 %v305, %v303
  %434 = vmatpush.bf16.msra.mxu0 %v320
  %435 = vmatpush.bf16.msra.mxu0 %v318
  %436 = vmatpush.bf16.msra.mxu0 %v316
  %437 = vmatpush.bf16.msra.mxu0 %v314
  %438 = vmatpush.bf16.msra.mxu0 %v312
  %439 = vmatpush.bf16.msra.mxu0 %v310
  %440 = vmatpush.bf16.msra.mxu0 %v308
  %441 = vmatpush.bf16.msra.mxu0 %v306
  %442 = vmatmul.bf16.gmra.mxu0 %v40
  %v443 = vpop.f32.mrf.mxu0
  %v444 = vadd.f32 %v110, %v443
  %v445 = vpop.f32.mrf.mxu0
  %v446 = vadd.f32 %v110, %v445
  %447 = vdwg.mxu0
  %448 = vmatpush.bf16.msra.mxu0 %v336
  %449 = vmatpush.bf16.msra.mxu0 %v334
  %450 = vmatpush.bf16.msra.mxu0 %v332
  %451 = vmatpush.bf16.msra.mxu0 %v330
  %452 = vmatpush.bf16.msra.mxu0 %v328
  %453 = vmatpush.bf16.msra.mxu0 %v326
  %454 = vmatpush.bf16.msra.mxu0 %v324
  %455 = vmatpush.bf16.msra.mxu0 %v322
  %456 = vmatmul.bf16.gmra.mxu0 %v41
  %v457 = vpop.f32.mrf.mxu0
  %v458 = vadd.f32 %v444, %v457
  %v459 = vpop.f32.mrf.mxu0
  %v460 = vadd.f32 %v446, %v459
  %461 = vdwg.mxu0
  %462 = vmatpush.bf16.msra.mxu0 %v352
  %463 = vmatpush.bf16.msra.mxu0 %v350
  %464 = vmatpush.bf16.msra.mxu0 %v348
  %465 = vmatpush.bf16.msra.mxu0 %v346
  %466 = vmatpush.bf16.msra.mxu0 %v344
  %467 = vmatpush.bf16.msra.mxu0 %v342
  %468 = vmatpush.bf16.msra.mxu0 %v340
  %469 = vmatpush.bf16.msra.mxu0 %v338
  %470 = vmatmul.bf16.gmra.mxu0 %v42
  %v471 = vpop.f32.mrf.mxu0
  %v472 = vadd.f32 %v458, %v471
  %v473 = vpop.f32.mrf.mxu0
  %v474 = vadd.f32 %v460, %v473
  %475 = vdwg.mxu0
  %476 = vmatpush.bf16.msra.mxu0 %v368
  %477 = vmatpush.bf16.msra.mxu0 %v366
  %478 = vmatpush.bf16.msra.mxu0 %v364
  %479 = vmatpush.bf16.msra.mxu0 %v362
  %480 = vmatpush.bf16.msra.mxu0 %v360
  %481 = vmatpush.bf16.msra.mxu0 %v358
  %482 = vmatpush.bf16.msra.mxu0 %v356
  %483 = vmatpush.bf16.msra.mxu0 %v354
  %484 = vmatmul.bf16.gmra.mxu0 %v43
  %v485 = vpop.f32.mrf.mxu0
  %v486 = vadd.f32 %v472, %v485
  %v487 = vpop.f32.mrf.mxu0
  %v488 = vadd.f32 %v474, %v487
  %489 = vdwg.mxu0
  %490 = vmatpush.bf16.msra.mxu0 %v321
  %491 = vmatpush.bf16.msra.mxu0 %v319
  %492 = vmatpush.bf16.msra.mxu0 %v317
  %493 = vmatpush.bf16.msra.mxu0 %v315
  %494 = vmatpush.bf16.msra.mxu0 %v313
  %495 = vmatpush.bf16.msra.mxu0 %v311
  %496 = vmatpush.bf16.msra.mxu0 %v309
  %497 = vmatpush.bf16.msra.mxu0 %v307
  %498 = vmatmul.bf16.gmra.mxu0 %v40
  %v499 = vpop.f32.mrf.mxu0
  %v500 = vadd.f32 %v111, %v499
  %v501 = vpop.f32.mrf.mxu0
  %v502 = vadd.f32 %v111, %v501
  %503 = vdwg.mxu0
  %504 = vmatpush.bf16.msra.mxu0 %v337
  %505 = vmatpush.bf16.msra.mxu0 %v335
  %506 = vmatpush.bf16.msra.mxu0 %v333
  %507 = vmatpush.bf16.msra.mxu0 %v331
  %508 = vmatpush.bf16.msra.mxu0 %v329
  %509 = vmatpush.bf16.msra.mxu0 %v327
  %510 = vmatpush.bf16.msra.mxu0 %v325
  %511 = vmatpush.bf16.msra.mxu0 %v323
  %512 = vmatmul.bf16.gmra.mxu0 %v41
  %v513 = vpop.f32.mrf.mxu0
  %v514 = vadd.f32 %v500, %v513
  %v515 = vpop.f32.mrf.mxu0
  %v516 = vadd.f32 %v502, %v515
  %517 = vdwg.mxu0
  %518 = vmatpush.bf16.msra.mxu0 %v353
  %519 = vmatpush.bf16.msra.mxu0 %v351
  %520 = vmatpush.bf16.msra.mxu0 %v349
  %521 = vmatpush.bf16.msra.mxu0 %v347
  %522 = vmatpush.bf16.msra.mxu0 %v345
  %523 = vmatpush.bf16.msra.mxu0 %v343
  %524 = vmatpush.bf16.msra.mxu0 %v341
  %525 = vmatpush.bf16.msra.mxu0 %v339
  %526 = vmatmul.bf16.gmra.mxu0 %v42
  %v527 = vpop.f32.mrf.mxu0
  %v528 = vadd.f32 %v514, %v527
  %v529 = vpop.f32.mrf.mxu0
  %v530 = vadd.f32 %v516, %v529
  %531 = vdwg.mxu0
  %532 = vmatpush.bf16.msra.mxu0 %v369
  %533 = vmatpush.bf16.msra.mxu0 %v367
  %534 = vmatpush.bf16.msra.mxu0 %v365
  %535 = vmatpush.bf16.msra.mxu0 %v363
  %536 = vmatpush.bf16.msra.mxu0 %v361
  %537 = vmatpush.bf16.msra.mxu0 %v359
  %538 = vmatpush.bf16.msra.mxu0 %v357
  %539 = vmatpush.bf16.msra.mxu0 %v355
  %540 = vmatmul.bf16.gmra.mxu0 %v43
  %v541 = vpop.f32.mrf.mxu0
  %v542 = vadd.f32 %v528, %v541
  %v543 = vpop.f32.mrf.mxu0
  %v544 = vadd.f32 %v530, %v543
  %545 = vdwg.mxu0
  %v546 = vmax.f32 %v486, 0.0
  %v547 = vmax.f32 %v542, 0.0
  %v548 = vmax.f32 %v488, 0.0
  %v549 = vmax.f32 %v544, 0.0
  %v550 = vpack.c.bf16 %v548, %v546
  %v551 = vpack.c.bf16 %v549, %v547
  %v552 = vld [vmem:[%s3] sm:$0xf]
  %v553 = vld [vmem:[%s3 + $0x4] sm:$0xf]
  %v554 = vld [vmem:[%s3 + $0x8] sm:$0xf]
  %v555 = vld [vmem:[%s3 + $0xc] sm:$0xf]
  %v556 = vld [vmem:[%s3 + $0x10] sm:$0xf]
  %v557 = vld [vmem:[%s3 + $0x14] sm:$0xf]
  %v558 = vld [vmem:[%s3 + $0x18] sm:$0xf]
  %v559 = vld [vmem:[%s3 + $0x1c] sm:$0xf]
  %v560 = vld [vmem:[%s3 + $0x20] sm:$0xf]
  %v561 = vld [vmem:[%s3 + $0x24] sm:$0xf]
  %v562 = vld [vmem:[%s3 + $0x28] sm:$0xf]
  %v563 = vld [vmem:[%s3 + $0x2c] sm:$0xf]
  %v564 = vld [vmem:[%s3 + $0x30] sm:$0xf]
  %v565 = vld [vmem:[%s3 + $0x34] sm:$0xf]
  %v566 = vld [vmem:[%s3 + $0x38] sm:$0xf]
  %v567 = vld [vmem:[%s3 + $0x3c] sm:$0xf]
  %v568 = vld [vmem:[%s3 + $0x40] sm:$0xf]
  %v569 = vld [vmem:[%s3 + $0x44] sm:$0xf]
  %v570 = vld [vmem:[%s3 + $0x48] sm:$0xf]
  %v571 = vld [vmem:[%s3 + $0x4c] sm:$0xf]
  %v572 = vld [vmem:[%s3 + $0x50] sm:$0xf]
  %v573 = vld [vmem:[%s3 + $0x54] sm:$0xf]
  %v574 = vld [vmem:[%s3 + $0x58] sm:$0xf]
  %v575 = vld [vmem:[%s3 + $0x5c] sm:$0xf]
  %v576 = vld [vmem:[%s3 + $0x60] sm:$0xf]
  %v577 = vld [vmem:[%s3 + $0x64] sm:$0xf]
  %v578 = vld [vmem:[%s3 + $0x68] sm:$0xf]
  %v579 = vld [vmem:[%s3 + $0x6c] sm:$0xf]
  %v580 = vld [vmem:[%s3 + $0x70] sm:$0xf]
  %v581 = vld [vmem:[%s3 + $0x74] sm:$0xf]
  %v582 = vld [vmem:[%s3 + $0x78] sm:$0xf]
  %v583 = vld [vmem:[%s3 + $0x7c] sm:$0xf]
  %v584 = vld [vmem:[%s4] sm:$0x1]
  %v586 = vperm.slane %v584, 0
  %v620 = vunpack.c.l.b16 %v552
  %v621 = vunpack.c.l.b16 %v553
  %v622 = vunpack.c.l.b16 %v554
  %v623 = vunpack.c.l.b16 %v555
  %v624 = vunpack.c.l.b16 %v556
  %v625 = vunpack.c.l.b16 %v557
  %v626 = vunpack.c.l.b16 %v558
  %v627 = vunpack.c.l.b16 %v559
  %v628 = vunpack.c.l.b16 %v560
  %v629 = vunpack.c.l.b16 %v561
  %v630 = vunpack.c.l.b16 %v562
  %v631 = vunpack.c.l.b16 %v563
  %v632 = vunpack.c.l.b16 %v564
  %v633 = vunpack.c.l.b16 %v565
  %v634 = vunpack.c.l.b16 %v566
  %v635 = vunpack.c.l.b16 %v567
  %v636 = vunpack.c.l.b16 %v568
  %v637 = vunpack.c.l.b16 %v569
  %v638 = vunpack.c.l.b16 %v570
  %v639 = vunpack.c.l.b16 %v571
  %v640 = vunpack.c.l.b16 %v572
  %v641 = vunpack.c.l.b16 %v573
  %v642 = vunpack.c.l.b16 %v574
  %v643 = vunpack.c.l.b16 %v575
  %v644 = vunpack.c.l.b16 %v576
  %v645 = vunpack.c.l.b16 %v577
  %v646 = vunpack.c.l.b16 %v578
  %v647 = vunpack.c.l.b16 %v579
  %v648 = vunpack.c.l.b16 %v580
  %v649 = vunpack.c.l.b16 %v581
  %v650 = vunpack.c.l.b16 %v582
  %v651 = vunpack.c.l.b16 %v583
  %v652 = vpack.c.b16 %v621, %v620
  %v653 = vpack.c.b16 %v623, %v622
  %v654 = vpack.c.b16 %v625, %v624
  %v655 = vpack.c.b16 %v627, %v626
  %v656 = vpack.c.b16 %v629, %v628
  %v657 = vpack.c.b16 %v631, %v630
  %v658 = vpack.c.b16 %v633, %v632
  %v659 = vpack.c.b16 %v635, %v634
  %v660 = vpack.c.b16 %v637, %v636
  %v661 = vpack.c.b16 %v639, %v638
  %v662 = vpack.c.b16 %v641, %v640
  %v663 = vpack.c.b16 %v643, %v642
  %v664 = vpack.c.b16 %v645, %v644
  %v665 = vpack.c.b16 %v647, %v646
  %v666 = vpack.c.b16 %v649, %v648
  %v667 = vpack.c.b16 %v651, %v650
  %684 = vmatpush.bf16.msra.mxu0 %v659
  %685 = vmatpush.bf16.msra.mxu0 %v658
  %686 = vmatpush.bf16.msra.mxu0 %v657
  %687 = vmatpush.bf16.msra.mxu0 %v656
  %688 = vmatpush.bf16.msra.mxu0 %v655
  %689 = vmatpush.bf16.msra.mxu0 %v654
  %690 = vmatpush.bf16.msra.mxu0 %v653
  %691 = vmatpush.bf16.msra.mxu0 %v652
  %692 = vmatmul.bf16.gmra.mxu0 %v550
  %v693 = vpop.f32.mrf.mxu0
  %v694 = vadd.f32 %v586, %v693
  %v695 = vpop.f32.mrf.mxu0
  %v696 = vadd.f32 %v586, %v695
  %697 = vdwg.mxu0
  %698 = vmatpush.bf16.msra.mxu0 %v667
  %699 = vmatpush.bf16.msra.mxu0 %v666
  %700 = vmatpush.bf16.msra.mxu0 %v665
  %701 = vmatpush.bf16.msra.mxu0 %v664
  %702 = vmatpush.bf16.msra.mxu0 %v663
  %703 = vmatpush.bf16.msra.mxu0 %v662
  %704 = vmatpush.bf16.msra.mxu0 %v661
  %705 = vmatpush.bf16.msra.mxu0 %v660
  %706 = vmatmul.bf16.gmra.mxu0 %v551
  %v707 = vpop.f32.mrf.mxu0
  %v708 = vadd.f32 %v694, %v707
  %v709 = vpop.f32.mrf.mxu0
  %v710 = vadd.f32 %v696, %v709
  %711 = vdwg.mxu0
  %v712 = vmax.f32 %v708, 0.0
  %v713 = vmax.f32 %v710, 0.0
  %v714 = vpack.c.bf16 %v713, %v712
  %v715 = vld [vmem:[%s5] sm:$0xf]
  %v716 = vld [vmem:[%s5 + $0x4] sm:$0xf]
  %v717 = vld [vmem:[%s5 + $0x8] sm:$0xf]
  %v718 = vld [vmem:[%s5 + $0xc] sm:$0xf]
  %v719 = vld [vmem:[%s5 + $0x10] sm:$0xf]
  %v720 = vld [vmem:[%s5 + $0x14] sm:$0xf]
  %v721 = vld [vmem:[%s5 + $0x18] sm:$0xf]
  %v722 = vld [vmem:[%s5 + $0x1c] sm:$0xf]
  %v723 = vld [vmem:[%s5 + $0x20] sm:$0xf]
  %v724 = vld [vmem:[%s5 + $0x24] sm:$0xf]
  %v725 = vld [vmem:[%s5 + $0x28] sm:$0xf]
  %v726 = vld [vmem:[%s5 + $0x2c] sm:$0xf]
  %v727 = vld [vmem:[%s5 + $0x30] sm:$0xf]
  %v728 = vld [vmem:[%s5 + $0x34] sm:$0xf]
  %v729 = vld [vmem:[%s5 + $0x38] sm:$0xf]
  %v730 = vld [vmem:[%s5 + $0x3c] sm:$0xf]
  %v731 = vld [vmem:[%s6] sm:$0x1]
  %v733 = vperm.slane %v731, 0
  %v751 = vunpack.c.l.b16 %v715
  %v752 = vunpack.c.l.b16 %v716
  %v753 = vunpack.c.l.b16 %v717
  %v754 = vunpack.c.l.b16 %v718
  %v755 = vunpack.c.l.b16 %v719
  %v756 = vunpack.c.l.b16 %v720
  %v757 = vunpack.c.l.b16 %v721
  %v758 = vunpack.c.l.b16 %v722
  %v759 = vunpack.c.l.b16 %v723
  %v760 = vunpack.c.l.b16 %v724
  %v761 = vunpack.c.l.b16 %v725
  %v762 = vunpack.c.l.b16 %v726
  %v763 = vunpack.c.l.b16 %v727
  %v764 = vunpack.c.l.b16 %v728
  %v765 = vunpack.c.l.b16 %v729
  %v766 = vunpack.c.l.b16 %v730
  %v767 = vpack.c.b16 %v752, %v751
  %v768 = vpack.c.b16 %v754, %v753
  %v769 = vpack.c.b16 %v756, %v755
  %v770 = vpack.c.b16 %v758, %v757
  %v771 = vpack.c.b16 %v760, %v759
  %v772 = vpack.c.b16 %v762, %v761
  %v773 = vpack.c.b16 %v764, %v763
  %v774 = vpack.c.b16 %v766, %v765
  %783 = vmatpush.bf16.msra.mxu0 %v774
  %784 = vmatpush.bf16.msra.mxu0 %v773
  %785 = vmatpush.bf16.msra.mxu0 %v772
  %786 = vmatpush.bf16.msra.mxu0 %v771
  %787 = vmatpush.bf16.msra.mxu0 %v770
  %788 = vmatpush.bf16.msra.mxu0 %v769
  %789 = vmatpush.bf16.msra.mxu0 %v768
  %790 = vmatpush.bf16.msra.mxu0 %v767
  %791 = vmatmul.bf16.gmra.mxu0 %v714
  %v792 = vpop.f32.mrf.mxu0
  %v793 = vadd.f32 %v733, %v792
  %v794 = vpop.f32.mrf.mxu0
  %v795 = vadd.f32 %v733, %v794
  %796 = vdwg.mxu0
  %v797 = vmax.f32 %v793, 0.0
  %v798 = vmax.f32 %v795, 0.0
  %v799 = vpack.c.bf16 %v798, %v797
  %v800 = vld [vmem:[%s7] sm:$0xf]
  %v801 = vld [vmem:[%s7 + $0x4] sm:$0xf]
  %v802 = vld [vmem:[%s7 + $0x8] sm:$0xf]
  %v803 = vld [vmem:[%s7 + $0xc] sm:$0xf]
  %v804 = vld [vmem:[%s7 + $0x10] sm:$0xf]
  %v805 = vld [vmem:[%s7 + $0x14] sm:$0xf]
  %v806 = vld [vmem:[%s7 + $0x18] sm:$0xf]
  %v807 = vld [vmem:[%s7 + $0x1c] sm:$0xf]
  %v808 = vld [vmem:[%s7 + $0x20] sm:$0xf]
  %v809 = vld [vmem:[%s7 + $0x24] sm:$0xf]
  %v810 = vld [vmem:[%s7 + $0x28] sm:$0xf]
  %v811 = vld [vmem:[%s7 + $0x2c] sm:$0xf]
  %v812 = vld [vmem:[%s7 + $0x30] sm:$0xf]
  %v813 = vld [vmem:[%s7 + $0x34] sm:$0xf]
  %v814 = vld [vmem:[%s7 + $0x38] sm:$0xf]
  %v815 = vld [vmem:[%s7 + $0x3c] sm:$0xf]
  %v816 = vld [vmem:[%s8] sm:$0x1]
  %v818 = vperm.slane %v816, 0
  %v836 = vunpack.c.l.b16 %v800
  %v837 = vunpack.c.l.b16 %v801
  %v838 = vunpack.c.l.b16 %v802
  %v839 = vunpack.c.l.b16 %v803
  %v840 = vunpack.c.l.b16 %v804
  %v841 = vunpack.c.l.b16 %v805
  %v842 = vunpack.c.l.b16 %v806
  %v843 = vunpack.c.l.b16 %v807
  %v844 = vunpack.c.l.b16 %v808
  %v845 = vunpack.c.l.b16 %v809
  %v846 = vunpack.c.l.b16 %v810
  %v847 = vunpack.c.l.b16 %v811
  %v848 = vunpack.c.l.b16 %v812
  %v849 = vunpack.c.l.b16 %v813
  %v850 = vunpack.c.l.b16 %v814
  %v851 = vunpack.c.l.b16 %v815
  %v852 = vpack.c.b16 %v837, %v836
  %v853 = vpack.c.b16 %v839, %v838
  %v854 = vpack.c.b16 %v841, %v840
  %v855 = vpack.c.b16 %v843, %v842
  %v856 = vpack.c.b16 %v845, %v844
  %v857 = vpack.c.b16 %v847, %v846
  %v858 = vpack.c.b16 %v849, %v848
  %v859 = vpack.c.b16 %v851, %v850
  %868 = vmatpush.bf16.msra.mxu0 %v859
  %869 = vmatpush.bf16.msra.mxu0 %v858
  %870 = vmatpush.bf16.msra.mxu0 %v857
  %871 = vmatpush.bf16.msra.mxu0 %v856
  %872 = vmatpush.bf16.msra.mxu0 %v855
  %873 = vmatpush.bf16.msra.mxu0 %v854
  %874 = vmatpush.bf16.msra.mxu0 %v853
  %875 = vmatpush.bf16.msra.mxu0 %v852
  %876 = vmatmul.bf16.gmra.mxu0 %v799
  %v877 = vpop.f32.mrf.mxu0
  %v878 = vadd.f32 %v818, %v877
  %v879 = vpop.f32.mrf.mxu0
  %v880 = vadd.f32 %v818, %v879
  %881 = vdwg.mxu0
  %882 = vmax.xlane.f32.xlu0 %v878
  %v883 = vpop.xlane.xlu0 %882
  %884 = vmax.xlane.f32.xlu0 %v880
  %v885 = vpop.xlane.xlu0 %884
  %v886 = vsub.f32 %v878, %v883
  %v887 = vsub.f32 %v880, %v885
  %v888 = vmul.f32 %v886, 1.442695
  %v889 = vpow.pop %v888
  %v890 = vmul.f32 %v887, 1.442695
  %v891 = vpow.pop %v890
  %892 = vadd.xlane.f32.xlu0 %v889
  %v893 = vpop.xlane.xlu0 %892
  %894 = vadd.xlane.f32.xlu0 %v891
  %v895 = vpop.xlane.xlu0 %894
  %v896 = vrcp.pop %v893
  %v897 = vmul.f32 %v893, %v896
  %v898 = vsub.f32 1.0, %v897
  %v899 = vmul.f32 %v896, %v898
  %v900 = vadd.f32 %v896, %v899
  %vm901 = vweird.f32 %v893
  %vm902 = vweird.f32 %v896
  %vm903 = vmor %vm901, %vm902
  %v904 = vsel %vm903, %v896, %v900
  %v905 = vand.u32 2147483647, %v893
  %vm906 = vcmp.eq.f32.partialorder %v905, 8.507059e+37
  %v907 = vand.u32 %v893, 2147483648
  %v908 = vor.u32 1.1754944e-38, %v907
  %v909 = vsel %vm906, %v908, %v904
  %v910 = vrcp.pop %v895
  %v911 = vmul.f32 %v895, %v910
  %v912 = vsub.f32 1.0, %v911
  %v913 = vmul.f32 %v910, %v912
  %v914 = vadd.f32 %v910, %v913
  %vm915 = vweird.f32 %v895
  %vm916 = vweird.f32 %v910
  %vm917 = vmor %vm915, %vm916
  %v918 = vsel %vm917, %v910, %v914
  %v919 = vand.u32 2147483647, %v895
  %vm920 = vcmp.eq.f32.partialorder %v919, 8.507059e+37
  %v921 = vand.u32 %v895, 2147483648
  %v922 = vor.u32 1.1754944e-38, %v921
  %v923 = vsel %vm920, %v922, %v918
  %v924 = vmul.f32 %v889, %v909
  %v925 = vmul.f32 %v891, %v923
  %v926 = vpack.c.bf16 %v924, %v924
  %v927 = vpack.c.bf16 %v925, %v925
  %928 = vst [vmem:[%s9] sm:$0xf] %v926
  %929 = vst [vmem:[%s9 + $0x4] sm:$0xf] %v927
  // Predicated region
  $region38: #{mlp2_forward.1} parent=0 // pred_check
    _
  $region39: #{mlp2_forward.1} parent=0 // pred_check_branch
    %931 = sbr.rel (0) target = $region41
  $region40: #{mlp2_forward.1} parent=0 // pred_region
    _
  $region41: #{mlp2_forward.1} parent=0 // pred_fallthru
    _
  // Predicated region
  $region42: #{mlp2_forward.1} parent=0 // pred_check
    _
  $region43: #{mlp2_forward.1} parent=0 // pred_check_branch
    %933 = sbr.rel (0) target = $region45
  $region44: #{mlp2_forward.1} parent=0 // pred_region
    _
  $region45: #{mlp2_forward.1} parent=0 // pred_fallthru
    _

</llo_original>
